<compile_context>
chip_gen: v6e
topology: v6e:2x2x1
jax: 0.10.0
libtpu: 0.0.40
codegen_flags: <defaults>
</compile_context>

<pallas_src>
import jax
import jax.numpy as jnp
from jax import lax
from jax.experimental import pallas as pl
from jax.experimental.pallas import tpu as pltpu

_LANE = 128
_SUBLANE = 8
_NEG = -1e30  # fill for padded vocab columns; vanishes under exp() in the logsumexp


def _round_up(x, m):
    return (x + m - 1) // m * m


# --------------------------------------------------------------------------------------
# One-time parameter prep (hoist out of the training step and cache the result).
# --------------------------------------------------------------------------------------
def prepare_bigram_table(table):
    """Pad the (V, V) embedding table to (v_pad, v_pad), v_pad = round_up(V, 128).

    Padded columns hold _NEG (ignored by the in-kernel logsumexp / sliced off in the
    wrapper); padded rows are never selected because token ids are always < V.
    Call this ONCE at parameter init and reuse the result every step.
    """
    V = int(table.shape[0])
    v_pad = _round_up(V, _LANE)
    if v_pad == V:
        return table
    padded = jnp.full((v_pad, v_pad), _NEG, dtype=table.dtype)
    return padded.at[:V, :V].set(table)


def _choose_tile_bt(bt, requested):
    if requested is None:
        requested = 1024 if bt >= 4096 else 512
    t = _round_up(min(requested, _round_up(bt, _SUBLANE)), _SUBLANE)
    t = max(t, _SUBLANE)
    # v7x has 2 TensorCores: make sure the "parallel" grid has >= 2 tiles when BT allows it.
    if _round_up(bt, t) // t < 2 and bt > _SUBLANE:
        t = _round_up((bt + 1) // 2, _SUBLANE)
    return t


def _vmem_limit_bytes(tile_bt, v_pad, table_itemsize, with_logits):
    table_b = v_pad * v_pad * table_itemsize          # resident table, single-buffered
    io_small = 2 * 2 * (2 * tile_bt * 4)              # idx + tgt blocks, double-buffered
    logits_tile = tile_bt * v_pad * 4
    out_b = 2 * logits_tile if with_logits else 0     # double-buffered logits tile
    temps = 6 * logits_tile                           # one-hot / logits_T / exp temporaries
    est = 2 * (table_b + io_small + out_b + temps) + (2 << 20)
    return int(min(max(est, 4 << 20), 32 << 20))


# --------------------------------------------------------------------------------------
# Kernels
# --------------------------------------------------------------------------------------
def _ce_partial_sum(logits_t, vocab_iota, tgt_row, row_valid):
    """Cross-entropy partial sum for one tile, in transposed (vocab-on-sublanes) layout.

    logits_t  : (v_pad, tile_bt) f32, logits_t[v, r] = logits[r, v]
    vocab_iota: (v_pad, tile_bt) int32 vocab index along sublanes
    tgt_row   : (1, tile_bt) int32 targets (lane-major)
    row_valid : (1, tile_bt) bool  -- masks BT-padding rows
    returns   : (1, 1) f32 sum over valid rows of (logsumexp(logits) - logits[target])
    """
    row_max = jnp.max(logits_t, axis=0, keepdims=True)                        # (1, tile_bt)
    sum_exp = jnp.sum(jnp.exp(logits_t - row_max), axis=0, keepdims=True)
    lse = jnp.log(sum_exp) + row_max                                          # (1, tile_bt)
    # Target extraction as compare+select feeding straight into the sublane reduction.
    tgt_logit = jnp.sum(jnp.where(vocab_iota == tgt_row, logits_t, 0.0),
                        axis=0, keepdims=True)                                # (1, tile_bt)
    row_loss = jnp.where(row_valid, lse - tgt_logit, 0.0)                     # (1, tile_bt)
    return jnp.sum(row_loss, axis=1, keepdims=True)                           # (1, 1)


def _make_infer_kernel():
    def kernel(idx_ref, table_ref, logits_ref):
        v_pad = table_ref.shape[0]
        tile_bt = idx_ref.shape[-1]
        vocab_iota = lax.broadcasted_iota(jnp.int32, (v_pad, tile_bt), 0)
        one_hot = (vocab_iota == idx_ref[...]).astype(table_ref.dtype)        # (v_pad, tile_bt)
        # logits[r, v] = table[idx[r], v]  -- contract the sublane axis; lane-dense store.
        logits_ref[...] = lax.dot_general(
            one_hot, table_ref[...],
            dimension_numbers=(((0,), (0,)), ((), ())),
            preferred_element_type=jnp.float32).astype(logits_ref.dtype)
    return kernel


def _make_loss_kernel(bt_total):
    def kernel(idx_ref, tgt_ref, table_ref, loss_ref):
        v_pad = table_ref.shape[0]
        tile_bt = idx_ref.shape[-1]
        vocab_iota = lax.broadcasted_iota(jnp.int32, (v_pad, tile_bt), 0)
        one_hot = (vocab_iota == idx_ref[...]).astype(table_ref.dtype)        # (v_pad, tile_bt)
        # logits_T[v, r] = table[idx[r], v]  (vocab on sublanes; no in-kernel transpose needed)
        logits_t = lax.dot_general(
            table_ref[...], one_hot,
            dimension_numbers=(((0,), (0,)), ((), ())),
            preferred_element_type=jnp.float32)                               # (v_pad, tile_bt)
        row_ids = (pl.program_id(0) * tile_bt
                   + lax.broadcasted_iota(jnp.int32, (1, tile_bt), 1))
        loss_ref[...] = _ce_partial_sum(logits_t, vocab_iota, tgt_ref[...],
                                        row_ids < bt_total)
    return kernel


def _make_train_kernel(bt_total):
    def kernel(idx_ref, tgt_ref, table_ref, logits_ref, loss_ref):
        v_pad = table_ref.shape[0]
        tile_bt = idx_ref.shape[-1]
        vocab_iota = lax.broadcasted_iota(jnp.int32, (v_pad, tile_bt), 0)
        one_hot = (vocab_iota == idx_ref[...]).astype(table_ref.dtype)        # (v_pad, tile_bt)
        # Lane-dense row-major logits for the HBM store.
        logits_ref[...] = lax.dot_general(
            one_hot, table_ref[...],
            dimension_numbers=(((0,), (0,)), ((), ())),
            preferred_element_type=jnp.float32).astype(logits_ref.dtype)
        # CE in transposed layout: one extra tiny matmul instead of an XLU transpose of
        # the lane-major targets (the kernel is store-bound, MXU has ample slack).
        logits_t = lax.dot_general(
            table_ref[...], one_hot,
            dimension_numbers=(((0,), (0,)), ((), ())),
            preferred_element_type=jnp.float32)                               # (v_pad, tile_bt)
        row_ids = (pl.program_id(0) * tile_bt
                   + lax.broadcasted_iota(jnp.int32, (1, tile_bt), 1))
        loss_ref[...] = _ce_partial_sum(logits_t, vocab_iota, tgt_ref[...],
                                        row_ids < bt_total)
    return kernel


# --------------------------------------------------------------------------------------
# Wrapper
# --------------------------------------------------------------------------------------
def bigram_forward(idx, table, targets=None, *, vocab_size=None,
                   return_logits=True, padded_outputs=False, tile_bt=None):
    """Pallas-backed equivalent of BigramLanguageModel.forward.

    table      : pass prepare_bigram_table(raw_table) together with vocab_size=V (preferred,
                 hoists the padding out of the step); passing the raw (V, V) table also works
                 but pays a per-call padding pass.
    return_logits=False (with targets) runs the loss-only kernel (no logits HBM writeback).
    padded_outputs=True returns the padded (bt_pad, v_pad) logits buffer (no post-kernel slice).
    """
    if vocab_size is None:
        vocab_size = int(table.shape[0])
    if table.shape[0] % _LANE != 0:
        # Fallback: prefer prepare_bigram_table() once at parameter init (per-call HBM cost).
        table = prepare_bigram_table(table)
    V = vocab_size
    v_pad = int(table.shape[0])

    B, T = idx.shape
    BT = B * T
    tile = _choose_tile_bt(BT, tile_bt)
    bt_pad = _round_up(BT, tile)
    num_tiles = bt_pad // tile

    # Lane-major token ids: one contiguous tile_bt*4-byte DMA per tile.
    idx_t = jnp.pad(idx.reshape(-1).astype(jnp.int32),
                    (0, bt_pad - BT)).reshape(num_tiles, 1, tile)

    idx_spec = pl.BlockSpec((None, 1, tile), lambda i: (i, 0, 0))
    tgt_spec = pl.BlockSpec((None, 1, tile), lambda i: (i, 0, 0))
    # Resident table: constant block index -> DMA'd once; single-buffered (no wasted 2nd buffer).
    table_spec = pl.BlockSpec((v_pad, v_pad), lambda i: (0, 0),
                              pipeline_mode=pl.Buffered(1))
    logits_spec = pl.BlockSpec((tile, v_pad), lambda i: (i, 0))
    loss_spec = pl.BlockSpec((None, 1, 1), lambda i: (i, 0, 0))

    with_logits = (targets is None) or return_logits
    cparams = pltpu.CompilerParams(
        dimension_semantics=("parallel",),   # tiles are independent (v7x: both TensorCores)
        vmem_limit_bytes=_vmem_limit_bytes(tile, v_pad, table.dtype.itemsize, with_logits),
    )

    if targets is None:
        logits_p = pl.pallas_call(
            _make_infer_kernel(),
            grid=(num_tiles,),
            in_specs=[idx_spec, table_spec],
            out_specs=logits_spec,
            out_shape=jax.ShapeDtypeStruct((bt_pad, v_pad), table.dtype),
            compiler_params=cparams,
        )(idx_t, table)
        if padded_outputs:
            return logits_p, None
        # PyTorch returns logits of shape (B, T, C) and loss=None in this branch.
        return logits_p[:BT, :V].reshape(B, T, V), None

    tgt_t = jnp.pad(targets.reshape(-1).astype(jnp.int32),
                    (0, bt_pad - BT)).reshape(num_tiles, 1, tile)

    if not return_logits:
        part = pl.pallas_call(
            _make_loss_kernel(BT),
            grid=(num_tiles,),
            in_specs=[idx_spec, tgt_spec, table_spec],
            out_specs=loss_spec,
            out_shape=jax.ShapeDtypeStruct((num_tiles, 1, 1), jnp.float32),
            compiler_params=cparams,
        )(idx_t, tgt_t, table)
        return None, jnp.sum(part) / BT

    logits_p, part = pl.pallas_call(
        _make_train_kernel(BT),
        grid=(num_tiles,),
        in_specs=[idx_spec, tgt_spec, table_spec],
        out_specs=(logits_spec, loss_spec),
        out_shape=(jax.ShapeDtypeStruct((bt_pad, v_pad), table.dtype),
                   jax.ShapeDtypeStruct((num_tiles, 1, 1), jnp.float32)),
        compiler_params=cparams,
    )(idx_t, tgt_t, table)

    loss = jnp.sum(part) / BT
    if padded_outputs:
        return logits_p, loss
    # PyTorch returns the .view(B*T, C) logits and a scalar mean loss in this branch.
    return logits_p[:BT, :V], loss


# --------------------------------------------------------------------------------------
# Pure-JAX reference for validation
# --------------------------------------------------------------------------------------
def _reference_forward(idx, table, targets=None):
    logits = table[idx]  # (B, T, V)
    if targets is None:
        return logits, None
    B, T, V = logits.shape
    lg = logits.reshape(B * T, V)
    tg = targets.reshape(B * T)
    lse = jax.nn.logsumexp(lg, axis=-1)
    tgt_logit = jnp.take_along_axis(lg, tg[:, None], axis=-1)[:, 0]
    return lg, jnp.mean(lse - tgt_logit)


if __name__ == "__main__":
    key = jax.random.PRNGKey(0)
    k_tab, k_idx, k_tgt, k_idx2, k_tgt2 = jax.random.split(key, 5)

    vocab_size = 65   # e.g. tiny-shakespeare char vocab
    B, T = 2, 8

    # nn.Embedding default init: N(0, 1)
    table = jax.random.normal(k_tab, (vocab_size, vocab_size), dtype=jnp.float32)
    idx = jax.random.randint(k_idx, (B, T), 0, vocab_size, dtype=jnp.int32)
    targets = jax.random.randint(k_tgt, (B, T), 0, vocab_size, dtype=jnp.int32)

    # One-time table prep, hoisted out of the step (perf review item 1).
    table_p = prepare_bigram_table(table)

    # targets=None branch (inference kernel, no loss work)
    logits_nt, loss_nt = bigram_forward(idx, table_p, vocab_size=vocab_size)
    jax.block_until_ready(logits_nt)
    assert logits_nt.shape == (B, T, vocab_size) and loss_nt is None
    assert jnp.allclose(logits_nt, table[idx], atol=1e-5, rtol=1e-5)

    # full training branch (logits + loss)
    logits, loss = bigram_forward(idx, table_p, targets, vocab_size=vocab_size)
    jax.block_until_ready((logits, loss))
    ref_logits, ref_loss = _reference_forward(idx, table, targets)
    assert logits.shape == (B * T, vocab_size)
    assert jnp.allclose(logits, ref_logits, atol=1e-5, rtol=1e-5)
    assert jnp.allclose(loss, ref_loss, atol=1e-5, rtol=1e-5)

    # loss-only branch: skips the logits HBM writeback entirely
    no_logits, loss_only = bigram_forward(idx, table_p, targets, vocab_size=vocab_size,
                                          return_logits=False)
    jax.block_until_ready(loss_only)
    assert no_logits is None
    assert jnp.allclose(loss_only, ref_loss, atol=1e-5, rtol=1e-5)

    # larger shape: multi-tile parallel grid + BT padding (800 rows -> 2 tiles of 512)
    B2, T2 = 4, 200
    idx2 = jax.random.randint(k_idx2, (B2, T2), 0, vocab_size, dtype=jnp.int32)
    tgt2 = jax.random.randint(k_tgt2, (B2, T2), 0, vocab_size, dtype=jnp.int32)
    logits2, loss2 = bigram_forward(idx2, table_p, tgt2, vocab_size=vocab_size)
    jax.block_until_ready((logits2, loss2))
    ref_logits2, ref_loss2 = _reference_forward(idx2, table, tgt2)
    assert logits2.shape == (B2 * T2, vocab_size)
    assert jnp.allclose(logits2, ref_logits2, atol=1e-5, rtol=1e-5)
    assert jnp.allclose(loss2, ref_loss2, atol=1e-5, rtol=1e-5)

    _, loss2b = bigram_forward(idx2, table_p, tgt2, vocab_size=vocab_size,
                               return_logits=False)
    jax.block_until_ready(loss2b)
    assert jnp.allclose(loss2b, ref_loss2, atol=1e-5, rtol=1e-5)

    print("KERNEL_OK")
</pallas_src>

<mosaic_0001>
module attributes {stable_mosaic.version = 11 : i64} {
  func.func @kernel(%arg0: i32, %arg1: memref<1x1x8xi32, #tpu.memory_space<vmem>>, %arg2: memref<128x128xf32, #tpu.memory_space<vmem>>, %arg3: memref<8x128xf32, #tpu.memory_space<vmem>>) attributes {dimension_semantics = [#tpu.dimension_semantics<parallel>], iteration_bounds = array<i64: 2>, scalar_prefetch = 0 : i64, scratch_operands = 0 : i64, tpu.core_type = #tpu.core_type<tc>, window_params = [{transform_indices = @transform_0, window_bounds = array<i64: 1, 1, 8>}, {pipeline_mode = #tpu.pipeline_mode<synchronous>, transform_indices = @transform_1, window_bounds = array<i64: 128, 128>}, {transform_indices = @transform_2, window_bounds = array<i64: 8, 128>}]} {
    %0 = tpu.iota {dimensions = array<i32: 0>} : vector<128x8xi32>
    %c0 = arith.constant 0 : index
    %c0_0 = arith.constant 0 : index
    %c0_1 = arith.constant 0 : index
    %1 = vector.load %arg1[%c0, %c0_0, %c0_1] : memref<1x1x8xi32, #tpu.memory_space<vmem>>, vector<1x1x8xi32>
    %2 = vector.shape_cast %1 : vector<1x1x8xi32> to vector<1x8xi32>
    %3 = vector.broadcast %2 : vector<1x8xi32> to vector<128x8xi32>
    %4 = arith.cmpi eq, %0, %3 : vector<128x8xi32>
    %5 = arith.extui %4 : vector<128x8xi1> to vector<128x8xi32>
    %6 = arith.sitofp %5 : vector<128x8xi32> to vector<128x8xf32>
    %c0_2 = arith.constant 0 : index
    %c0_3 = arith.constant 0 : index
    %7 = vector.load %arg2[%c0_2, %c0_3] : memref<128x128xf32, #tpu.memory_space<vmem>>, vector<128x128xf32>
    %cst = arith.constant dense<0.000000e+00> : vector<8x128xf32>
    %8 = tpu.matmul %6, %7, %cst {dimension_numbers = #tpu.dot_dimension_numbers<[0], [0], [1], [1], [0, 1, 1, 1], [], []>} : vector<128x8xf32>, vector<128x128xf32>, vector<8x128xf32> -> vector<8x128xf32>
    %c0_4 = arith.constant 0 : index
    %c0_5 = arith.constant 0 : index
    %9 = vector.load %arg3[%c0_4, %c0_5] : memref<8x128xf32, #tpu.memory_space<vmem>>, vector<8x128xf32>
    tpu.vector_store %arg3[%c0_4, %c0_5], %8 {strides = array<i32>} : memref<8x128xf32, #tpu.memory_space<vmem>>, vector<8x128xf32>,
    return
  }
  func.func @transform_0(%arg0: i32) -> (i32, i32, i32) {
    %c0_i32 = arith.constant 0 : i32
    %c0_i32_0 = arith.constant 0 : i32
    %c0_i32_1 = arith.constant 0 : i32
    return %arg0, %c0_i32, %c0_i32_0 : i32, i32, i32
  }
  func.func @transform_1(%arg0: i32) -> (i32, i32) {
    %c0_i32 = arith.constant 0 : i32
    %c0_i32_0 = arith.constant 0 : i32
    %c0_i32_1 = arith.constant 0 : i32
    return %c0_i32, %c0_i32_0 : i32, i32
  }
  func.func @transform_2(%arg0: i32) -> (i32, i32) {
    %c0_i32 = arith.constant 0 : i32
    %c0_i32_0 = arith.constant 0 : i32
    return %arg0, %c0_i32 : i32, i32
  }
}

</mosaic_0001>

<llo_original>
// kernel: tpu_custom_call.1
$region0: #{tpu_custom_call.1}
  #allocation0 [shape = 'u32[]', space=smem, size = 0x4, offset = 0x4, fixed_abs, tag = 'smem constant byte address 0x4 - core index']
  #allocation1 [shape = 'u32[144,128]{1,0:T(1,128)}', space=vmem, size = 0x12000, scoped, tag = 'internal scratch']
  %s0 = inlined_call_operand.hbm [shape: s32[2,1,8], index: 0, kind: input, shape index: {}]
  %s1 = inlined_call_operand.hbm [shape: f32[128,128], index: 1, kind: input, shape index: {}]
  %s2 = inlined_call_operand.hbm [shape: f32[16,128], index: 2, kind: output, shape index: {}]
  %s3 = sld [smem:[#allocation0]]
  $region49: #{tpu_custom_call.1} parent=0
    _
  %s5 = ssub.s32 1, %s3
  %s6 = scalar_select 0, %s5, %s3
  $region1: #{tpu_custom_call.1} parent=0
    #allocation2 [shape = 'u8[1024]{0}', space=vmem, size = 0x400, scoped, tag = 'input window, operand 0']
    #allocation3 [shape = 's32[2]{0}', space=sflag, size = 0x8, scoped, tag = 'scoped memory for tpu_custom_call.1']
    #allocation4 [shape = 's32[2]{0}', space=sflag, size = 0x8, scoped, tag = 'scoped memory for tpu_custom_call.1']
    #allocation5 [shape = 'u8[65536]{0}', space=vmem, size = 0x10000, scoped, tag = 'input window, operand 1, single buffered']
    #allocation6 [shape = 's32[1]{0}', space=sflag, size = 0x4, scoped, tag = 'scoped memory for tpu_custom_call.1']
    #allocation7 [shape = 'u8[8192]{0}', space=vmem, size = 0x2000, scoped, tag = 'output window, operand 0']
    %7 = vsyncpa [#allocation3], 0
    %s8 = scalar_lea.sflag [#allocation3], 1
    %9 = vsyncpa %s8, 0
    %10 = vsyncpa [#allocation6], 0
    %11 = vsyncpa [#allocation4], 0
    %s12 = scalar_lea.sflag [#allocation4], 1
    %13 = vsyncpa %s12, 0
    loop: start=0, step=1, limit=4
    $region2: #{tpu_custom_call.1} parent=1 // loop_pre_header
      _
    $region3: #{tpu_custom_call.1} parent=1 // loop_header
      %s15 = sphi 0, %s19
      %p16 = scmp.ge.s32.totalorder %s15, 4
      %s25 = sphi 0, %s27
      %s28 = sphi 0, %s25
      %s29 = sphi 0, %s28
      %s45 = sphi 0, %s29
      %s49 = sphi 0, %s49
      %s51 = sphi 0, %s49
      %s52 = sphi 0, %s51
      %s66 = sphi 0, %s52
      %s72 = sphi 0, %s74
      %s75 = sphi 0, %s72
      %s76 = sphi 0, %s75
      %s92 = sphi 0, %s76
    $region4: #{tpu_custom_call.1} parent=1 // loop_header_branch
      %18 = sbr.rel (%p16) target = $region8
    $region5: #{tpu_custom_call.1} parent=1 // loop_body
      %s20 = ssub.s32 %s15, 1
      %s21 = ssub.s32 %s15, 2
      %s22 = sadd.s32 %s15, 1
      %s23 = ssub.s32 %s15, %s22
      %p24 = scmp.eq.s32.totalorder %s23, 0
      %s26 = sadd.s32 %s25, 1
      %s27 = scalar_select %p24, %s25, %s26
      %p30 = pneg %p24
      %p31 = scmp.eq.s32.totalorder %s15, 1
      %p32 = por %p30, %p31
      %p33 = scmp.ne.s32.totalorder %s25, %s28
      %p34 = scmp.eq.s32.totalorder %s15, 0
      %p35 = por %p33, %p34
      %p36 = scmp.ne.s32.totalorder %s25, %s28
      %p37 = scmp.eq.s32.totalorder %s20, 1
      %p38 = por %p36, %p37
      %p39 = scmp.ne.s32.totalorder %s28, %s29
      %p40 = scmp.eq.s32.totalorder %s20, 0
      %p41 = por %p39, %p40
      %p42 = scmp.ne.s32.totalorder %s28, %s29
      %p43 = scmp.eq.s32.totalorder %s21, 1
      %p44 = por %p42, %p43
      %p46 = scmp.ne.s32.totalorder %s29, %s45
      %p47 = scmp.eq.s32.totalorder %s21, 0
      %p48 = por %p46, %p47
      %s50 = sadd.s32 %s49, 1
      %p53 = scmp.eq.s32.totalorder %s15, 1
      %p54 = scmp.ne.s32.totalorder %s49, %s51
      %p55 = scmp.eq.s32.totalorder %s15, 0
      %p56 = por %p54, %p55
      %p57 = scmp.ne.s32.totalorder %s49, %s51
      %p58 = scmp.eq.s32.totalorder %s20, 1
      %p59 = por %p57, %p58
      %p60 = scmp.ne.s32.totalorder %s51, %s52
      %p61 = scmp.eq.s32.totalorder %s20, 0
      %p62 = por %p60, %p61
      %p63 = scmp.ne.s32.totalorder %s51, %s52
      %p64 = scmp.eq.s32.totalorder %s21, 1
      %p65 = por %p63, %p64
      %p67 = scmp.ne.s32.totalorder %s52, %s66
      %p68 = scmp.eq.s32.totalorder %s21, 0
      %p69 = por %p67, %p68
      %s70 = ssub.s32 %s15, %s22
      %p71 = scmp.eq.s32.totalorder %s70, 0
      %s73 = sadd.s32 %s72, 1
      %s74 = scalar_select %p71, %s72, %s73
      %p77 = pneg %p71
      %p78 = scmp.eq.s32.totalorder %s15, 1
      %p79 = por %p77, %p78
      %p80 = scmp.ne.s32.totalorder %s72, %s75
      %p81 = scmp.eq.s32.totalorder %s15, 0
      %p82 = por %p80, %p81
      %p83 = scmp.ne.s32.totalorder %s72, %s75
      %p84 = scmp.eq.s32.totalorder %s20, 1
      %p85 = por %p83, %p84
      %p86 = scmp.ne.s32.totalorder %s75, %s76
      %p87 = scmp.eq.s32.totalorder %s20, 0
      %p88 = por %p86, %p87
      %p89 = scmp.ne.s32.totalorder %s75, %s76
      %p90 = scmp.eq.s32.totalorder %s21, 1
      %p91 = por %p89, %p90
      %p93 = scmp.ne.s32.totalorder %s76, %s92
      %p94 = scmp.eq.s32.totalorder %s21, 0
      %p95 = por %p93, %p94
      %p96 = scmp.le.s32.totalorder 1, %s15
      %p97 = scmp.lt.s32.totalorder %s15, 3
      %p98 = pnand %p96, %p97
      %p99 = pneg %p98
      // Predicated region
      $region9: #{tpu_custom_call.1} parent=5 // pred_check
        _
      $region10: #{tpu_custom_call.1} parent=5 // pred_check_branch
        %101 = sbr.rel (%p98) target = $region12
      $region11: #{tpu_custom_call.1} parent=5 // pred_region
        %s102 = ssub.s32 %s15, 1
        // Predicated region
        $region13: #{tpu_custom_call.1} parent=11 // pred_check
          %p103 = pneg %p62
        $region14: #{tpu_custom_call.1} parent=11 // pred_check_branch
          %105 = sbr.rel (%p103) target = $region16
        $region15: #{tpu_custom_call.1} parent=11 // pred_region
          %s107 = ssub.s32 2048, 2048
          %108 = vsyncadd [#allocation6], %s107
          %s109 = sshll.u32 [#allocation5], 4
          %s110 = int_to_ptr.vmem [resolvable:$true] %s109
          %115 = dma.hbm_to_vmem [thread:$0]  %s1, 2048, %s110, [#allocation6], 128, 128, 8
        $region16: #{tpu_custom_call.1} parent=11 // pred_fallthru
          _
      $region12: #{tpu_custom_call.1} parent=5 // pred_fallthru
        _
      %p116 = scmp.lt.s32.totalorder %s15, 2
      // Predicated region
      $region17: #{tpu_custom_call.1} parent=5 // pred_check
        %p117 = pneg %p116
      $region18: #{tpu_custom_call.1} parent=5 // pred_check_branch
        %119 = sbr.rel (%p117) target = $region20
      $region19: #{tpu_custom_call.1} parent=5 // pred_region
        // Predicated region
        $region21: #{tpu_custom_call.1} parent=19 // pred_check
          %p120 = pneg %p35
        $region22: #{tpu_custom_call.1} parent=19 // pred_check_branch
          %122 = sbr.rel (%p120) target = $region24
        $region23: #{tpu_custom_call.1} parent=19 // pred_region
          %s123 = sand.u32 %s25, 1
          %s124 = scalar_lea.sflag [#allocation3], %s123
          %s125 = sand.u32 %s25, 1
          %s126 = scalar_lea.vmem [#allocation2], %s125
          %s128 = ssub.s32 16, 16
          %129 = vsyncadd %s124, %s128
          %s130 = smul.addr %s15, 16
          %s131 = scalar_lea.hbm %s0, %s130
          %s133 = sshll.u32 %s126, 4
          %s134 = int_to_ptr.vmem [resolvable:$true] %s133
          %136 = dma.hbm_to_vmem [thread:$0]  %s131, 16, %s134, %s124
        $region24: #{tpu_custom_call.1} parent=19 // pred_fallthru
          _
      $region20: #{tpu_custom_call.1} parent=5 // pred_fallthru
        _
      %p137 = scmp.le.s32.totalorder 1, %s15
      %p138 = scmp.lt.s32.totalorder %s15, 3
      %p139 = pnand %p137, %p138
      %p140 = pneg %p139
      // Predicated region
      $region25: #{tpu_custom_call.1} parent=5 // pred_check
        _
      $region26: #{tpu_custom_call.1} parent=5 // pred_check_branch
        %142 = sbr.rel (%p139) target = $region28
      $region27: #{tpu_custom_call.1} parent=5 // pred_region
        %s143 = ssub.s32 %s15, 1
        %s144 = sand.u32 %s28, 1
        %s145 = scalar_lea.sflag [#allocation3], %s144
        %s146 = sand.u32 %s28, 1
        %s147 = scalar_lea.vmem [#allocation2], %s146
        // Predicated region
        $region29: #{tpu_custom_call.1} parent=27 // pred_check
          %p148 = pneg %p41
        $region30: #{tpu_custom_call.1} parent=27 // pred_check_branch
          %150 = sbr.rel (%p148) target = $region32
        $region31: #{tpu_custom_call.1} parent=27 // pred_region
          %151 = dma.done %s145, 16
        $region32: #{tpu_custom_call.1} parent=27 // pred_fallthru
          _
        // Predicated region
        $region33: #{tpu_custom_call.1} parent=27 // pred_check
          %p152 = pneg %p62
        $region34: #{tpu_custom_call.1} parent=27 // pred_check_branch
          %154 = sbr.rel (%p152) target = $region36
        $region35: #{tpu_custom_call.1} parent=27 // pred_region
          %155 = dma.done [#allocation6], 2048
        $region36: #{tpu_custom_call.1} parent=27 // pred_fallthru
          _
        %s156 = sand.u32 %s28, 1
        %s157 = scalar_lea.sflag [#allocation3], %s156
        %s158 = sand.u32 %s28, 1
        %s159 = scalar_lea.vmem [#allocation2], %s158
        %p160 = pneg %p41
        %p161 = pneg %p38
        %p162 = pneg %p62
        %p163 = pneg %p59
        %p164 = pneg %p88
        %p165 = pneg %p85
        %s166 = sand.u32 %s75, 1
        %s167 = scalar_lea.sflag [#allocation4], %s166
        %s168 = sand.u32 %s75, 1
        %s169 = smul.addr %s168, 8
        %s170 = scalar_lea.vmem [#allocation7], %s169
        %v171 = vlaneseq
        %v172 = vshrl.u32 %v171, 7
        %v173 = vadd.s32 %v172, 8
        %v174 = vadd.s32 %v172, 16
        %v175 = vadd.s32 %v172, 24
        %v176 = vadd.s32 %v172, 32
        %v177 = vadd.s32 %v172, 40
        %v178 = vadd.s32 %v172, 48
        %v179 = vadd.s32 %v172, 56
        %v180 = vadd.s32 %v172, 64
        %v181 = vadd.s32 %v172, 72
        %v182 = vadd.s32 %v172, 80
        %v183 = vadd.s32 %v172, 88
        %v184 = vadd.s32 %v172, 96
        %v185 = vadd.s32 %v172, 104
        %v186 = vadd.s32 %v172, 112
        %v187 = vadd.s32 %v172, 120
        %v188 = vld [vmem:[%s147] sm:$0x1]
        %v189 = vlaneseq
        %v190 = vshrl.u32 %v189, 7
        %v191 = vsub.s32 0, %v190
        %v192 = vrot.slane %v188, %v191
        %vm193 = vcmp.eq.s32.totalorder %v172, %v192
        %vm194 = vcmp.eq.s32.totalorder %v173, %v192
        %vm195 = vcmp.eq.s32.totalorder %v174, %v192
        %vm196 = vcmp.eq.s32.totalorder %v175, %v192
        %vm197 = vcmp.eq.s32.totalorder %v176, %v192
        %vm198 = vcmp.eq.s32.totalorder %v177, %v192
        %vm199 = vcmp.eq.s32.totalorder %v178, %v192
        %vm200 = vcmp.eq.s32.totalorder %v179, %v192
        %vm201 = vcmp.eq.s32.totalorder %v180, %v192
        %vm202 = vcmp.eq.s32.totalorder %v181, %v192
        %vm203 = vcmp.eq.s32.totalorder %v182, %v192
        %vm204 = vcmp.eq.s32.totalorder %v183, %v192
        %vm205 = vcmp.eq.s32.totalorder %v184, %v192
        %vm206 = vcmp.eq.s32.totalorder %v185, %v192
        %vm207 = vcmp.eq.s32.totalorder %v186, %v192
        %vm208 = vcmp.eq.s32.totalorder %v187, %v192
        %v209 = vsel %vm193, 1, 0
        %v210 = vsel %vm194, 1, 0
        %v211 = vsel %vm195, 1, 0
        %v212 = vsel %vm196, 1, 0
        %v213 = vsel %vm197, 1, 0
        %v214 = vsel %vm198, 1, 0
        %v215 = vsel %vm199, 1, 0
        %v216 = vsel %vm200, 1, 0
        %v217 = vsel %vm201, 1, 0
        %v218 = vsel %vm202, 1, 0
        %v219 = vsel %vm203, 1, 0
        %v220 = vsel %vm204, 1, 0
        %v221 = vsel %vm205, 1, 0
        %v222 = vsel %vm206, 1, 0
        %v223 = vsel %vm207, 1, 0
        %v224 = vsel %vm208, 1, 0
        %v225 = vcvt.s32.f32 %v209
        %v226 = vcvt.s32.f32 %v210
        %v227 = vcvt.s32.f32 %v211
        %v228 = vcvt.s32.f32 %v212
        %v229 = vcvt.s32.f32 %v213
        %v230 = vcvt.s32.f32 %v214
        %v231 = vcvt.s32.f32 %v215
        %v232 = vcvt.s32.f32 %v216
        %v233 = vcvt.s32.f32 %v217
        %v234 = vcvt.s32.f32 %v218
        %v235 = vcvt.s32.f32 %v219
        %v236 = vcvt.s32.f32 %v220
        %v237 = vcvt.s32.f32 %v221
        %v238 = vcvt.s32.f32 %v222
        %v239 = vcvt.s32.f32 %v223
        %v240 = vcvt.s32.f32 %v224
        %v241 = vld [vmem:[#allocation5] sm:$0xff]
        %v242 = vld [vmem:[#allocation5 + $0x8] sm:$0xff]
        %v243 = vld [vmem:[#allocation5 + $0x10] sm:$0xff]
        %v244 = vld [vmem:[#allocation5 + $0x18] sm:$0xff]
        %v245 = vld [vmem:[#allocation5 + $0x20] sm:$0xff]
        %v246 = vld [vmem:[#allocation5 + $0x28] sm:$0xff]
        %v247 = vld [vmem:[#allocation5 + $0x30] sm:$0xff]
        %v248 = vld [vmem:[#allocation5 + $0x38] sm:$0xff]
        %v249 = vld [vmem:[#allocation5 + $0x40] sm:$0xff]
        %v250 = vld [vmem:[#allocation5 + $0x48] sm:$0xff]
        %v251 = vld [vmem:[#allocation5 + $0x50] sm:$0xff]
        %v252 = vld [vmem:[#allocation5 + $0x58] sm:$0xff]
        %v253 = vld [vmem:[#allocation5 + $0x60] sm:$0xff]
        %v254 = vld [vmem:[#allocation5 + $0x68] sm:$0xff]
        %v255 = vld [vmem:[#allocation5 + $0x70] sm:$0xff]
        %v256 = vld [vmem:[#allocation5 + $0x78] sm:$0xff]
        %257 = vxpose.xlu0.b32.start [1/16] %v225, 128
        %258 = vxpose.xlu0.b32.cont [2/16] %v226, 128
        %259 = vxpose.xlu0.b32.cont [3/16] %v227, 128
        %260 = vxpose.xlu0.b32.cont [4/16] %v228, 128
        %261 = vxpose.xlu0.b32.cont [5/16] %v229, 128
        %262 = vxpose.xlu0.b32.cont [6/16] %v230, 128
        %263 = vxpose.xlu0.b32.cont [7/16] %v231, 128
        %264 = vxpose.xlu0.b32.cont [8/16] %v232, 128
        %265 = vxpose.xlu0.b32.cont [9/16] %v233, 128
        %266 = vxpose.xlu0.b32.cont [10/16] %v234, 128
        %267 = vxpose.xlu0.b32.cont [11/16] %v235, 128
        %268 = vxpose.xlu0.b32.cont [12/16] %v236, 128
        %269 = vxpose.xlu0.b32.cont [13/16] %v237, 128
        %270 = vxpose.xlu0.b32.cont [14/16] %v238, 128
        %271 = vxpose.xlu0.b32.cont [15/16] %v239, 128
        %272 = vxpose.xlu0.b32.end [16/16] %v240, 128
        %v273 = vpop.trf.xlu0
        %v274 = vpop.trf.xlu0
        %v275 = vpop.trf.xlu0
        %v276 = vpop.trf.xlu0
        %v277 = vpop.trf.xlu0
        %v278 = vpop.trf.xlu0
        %v279 = vpop.trf.xlu0
        %v280 = vpop.trf.xlu0
        %v281 = vpop.trf.xlu0
        %v282 = vpop.trf.xlu0
        %v283 = vpop.trf.xlu0
        %v284 = vpop.trf.xlu0
        %v285 = vpop.trf.xlu0
        %v286 = vpop.trf.xlu0
        %v287 = vpop.trf.xlu0
        %v288 = vpop.trf.xlu0
        %289 = vmatprep.subr.mxu0 0.0
        %290 = vmatpush1.msra.mxu0 %v256
        %291 = vmatprep.subr.mxu0 0.0
        %292 = vmatpush1.msra.mxu0 %v255
        %293 = vmatprep.subr.mxu0 0.0
        %294 = vmatpush1.msra.mxu0 %v254
        %295 = vmatprep.subr.mxu0 0.0
        %296 = vmatpush1.msra.mxu0 %v253
        %297 = vmatprep.subr.mxu0 0.0
        %298 = vmatpush1.msra.mxu0 %v252
        %299 = vmatprep.subr.mxu0 0.0
        %300 = vmatpush1.msra.mxu0 %v251
        %301 = vmatprep.subr.mxu0 0.0
        %302 = vmatpush1.msra.mxu0 %v250
        %303 = vmatprep.subr.mxu0 0.0
        %304 = vmatpush1.msra.mxu0 %v249
        %305 = vmatprep.subr.mxu0 0.0
        %306 = vmatpush1.msra.mxu0 %v248
        %307 = vmatprep.subr.mxu0 0.0
        %308 = vmatpush1.msra.mxu0 %v247
        %309 = vmatprep.subr.mxu0 0.0
        %310 = vmatpush1.msra.mxu0 %v246
        %311 = vmatprep.subr.mxu0 0.0
        %312 = vmatpush1.msra.mxu0 %v245
        %313 = vmatprep.subr.mxu0 0.0
        %314 = vmatpush1.msra.mxu0 %v244
        %315 = vmatprep.subr.mxu0 0.0
        %316 = vmatpush1.msra.mxu0 %v243
        %317 = vmatprep.subr.mxu0 0.0
        %318 = vmatpush1.msra.mxu0 %v242
        %319 = vmatprep.subr.mxu0 0.0
        %320 = vmatpush1.msra.mxu0 %v241
        %321 = vmatprep.subr.mxu0 0.0
        %322 = vmatpush2.msra.mxu0 0.0
        %323 = vmatprep.subr.mxu0 0.0
        %324 = vmatpush2.msra.mxu0 0.0
        %325 = vmatprep.subr.mxu0 0.0
        %326 = vmatpush2.msra.mxu0 0.0
        %327 = vmatprep.subr.mxu0 0.0
        %328 = vmatpush2.msra.mxu0 0.0
        %329 = vmatprep.subr.mxu0 0.0
        %330 = vmatpush2.msra.mxu0 0.0
        %331 = vmatprep.subr.mxu0 0.0
        %332 = vmatpush2.msra.mxu0 0.0
        %333 = vmatprep.subr.mxu0 0.0
        %334 = vmatpush2.msra.mxu0 0.0
        %335 = vmatprep.subr.mxu0 0.0
        %336 = vmatpush2.msra.mxu0 0.0
        %337 = vmatprep.subr.mxu0 0.0
        %338 = vmatpush2.msra.mxu0 0.0
        %339 = vmatprep.subr.mxu0 0.0
        %340 = vmatpush2.msra.mxu0 0.0
        %341 = vmatprep.subr.mxu0 0.0
        %342 = vmatpush2.msra.mxu0 0.0
        %343 = vmatprep.subr.mxu0 0.0
        %344 = vmatpush2.msra.mxu0 0.0
        %345 = vmatprep.subr.mxu0 0.0
        %346 = vmatpush2.msra.mxu0 0.0
        %347 = vmatprep.subr.mxu0 0.0
        %348 = vmatpush2.msra.mxu0 0.0
        %349 = vmatprep.subr.mxu0 0.0
        %350 = vmatpush2.msra.mxu0 0.0
        %351 = vmatprep.subr.mxu0 0.0
        %352 = vmatpush2.msra.mxu0 0.0
        %353 = vmatprep.mubr.f32.mxu0 0.0
        %354 = vmatmul.mubr.f32.gmra.mxu0 %v273
        %v355 = vpop.f32.mrf.mxu0
        %v356 = vadd.f32 0.0, %v355
        %v357 = vpop.f32.mrf.mxu0
        %358 = vdwg.mxu0
        %359 = vst [vmem:[%s170] sm:$0xff] %v356
        %s360 = sand.u32 %s75, 1
        %s361 = scalar_lea.sflag [#allocation4], %s360
        %s362 = sand.u32 %s75, 1
        %s363 = smul.addr %s362, 8
        %s364 = scalar_lea.vmem [#allocation7], %s363
        // Predicated region
        $region37: #{tpu_custom_call.1} parent=27 // pred_check
          %p365 = pneg %p85
        $region38: #{tpu_custom_call.1} parent=27 // pred_check_branch
          %367 = sbr.rel (%p365) target = $region40
        $region39: #{tpu_custom_call.1} parent=27 // pred_region
          %s369 = ssub.s32 128, 128
          %370 = vsyncadd %s361, %s369
          %s371 = smul.addr %s20, 128
          %s372 = scalar_lea.hbm %s2, %s371
          %s374 = sshll.u32 %s364, 4
          %s375 = int_to_ptr.vmem [resolvable:$true] %s374
          %377 = dma.vmem_to_hbm [thread:$0]  %s375, 128, %s372, %s361
        $region40: #{tpu_custom_call.1} parent=27 // pred_fallthru
          _
      $region28: #{tpu_custom_call.1} parent=5 // pred_fallthru
        _
      %p378 = scmp.le.s32.totalorder 2, %s15
      // Predicated region
      $region41: #{tpu_custom_call.1} parent=5 // pred_check
        %p379 = pneg %p378
      $region42: #{tpu_custom_call.1} parent=5 // pred_check_branch
        %381 = sbr.rel (%p379) target = $region44
      $region43: #{tpu_custom_call.1} parent=5 // pred_region
        %s382 = ssub.s32 %s15, 2
        // Predicated region
        $region45: #{tpu_custom_call.1} parent=43 // pred_check
          %p383 = pneg %p91
        $region46: #{tpu_custom_call.1} parent=43 // pred_check_branch
          %385 = sbr.rel (%p383) target = $region48
        $region47: #{tpu_custom_call.1} parent=43 // pred_region
          %s386 = sand.u32 %s76, 1
          %s387 = scalar_lea.sflag [#allocation4], %s386
          %s388 = sand.u32 %s76, 1
          %s389 = smul.addr %s388, 8
          %s390 = scalar_lea.vmem [#allocation7], %s389
          %391 = dma.done %s387, 128
        $region48: #{tpu_custom_call.1} parent=43 // pred_fallthru
          _
      $region44: #{tpu_custom_call.1} parent=5 // pred_fallthru
        _
    $region6: #{tpu_custom_call.1} parent=1 // loop_footer
      %s19 = sadd.s32 1, %s15
    $region7: #{tpu_custom_call.1} parent=1 // loop_footer_branch
      %14 = sbr.rel target = $region3
    $region8: #{tpu_custom_call.1} parent=1 // loop_exit
      _
    %392 = vsyncpa [#allocation3], 1
    %s393 = scalar_lea.sflag [#allocation3], 1
    %394 = vsyncpa %s393, 1
    %395 = vsyncpa [#allocation6], 1
    %396 = vsyncpa [#allocation4], 1
    %s397 = scalar_lea.sflag [#allocation4], 1
    %398 = vsyncpa %s397, 1

</llo_original>
